<compile_context>
chip_gen: v6e
topology: v6e:2x2x1
jax: 0.10.0
libtpu: 0.0.40
codegen_flags: <defaults>
</compile_context>

<pallas_src>
import jax
import jax.numpy as jnp
from jax.experimental import pallas as pl
from jax.experimental.pallas import tpu as pltpu


# ------------------------- generation-aware sizing ---------------------------
def _physical_vmem_bytes():
    """Physical VMEM per core; falls back to 128 MiB if the query is unavailable."""
    try:
        return int(pltpu.get_tpu_info().vmem_capacity_bytes)
    except Exception:
        return 128 << 20


def _pick_tile(dim, target, quantum):
    """Largest multiple of `quantum` that divides `dim` and is <= target;
    falls back to the full dimension (always a legal BlockSpec block)."""
    if dim <= target:
        return dim
    t = max((target // quantum) * quantum, quantum)
    while t >= quantum:
        if dim % t == 0:
            return t
        t -= quantum
    return dim


# ---------------------------- LayerNorm kernel --------------------------------
def _layernorm_kernel(h_ref, g_ref, b_ref, o_ref):
    """Final LayerNorm, producing bf16 normalized hidden for the lm_head matmul."""
    h = h_ref[...].astype(jnp.float32)
    mu = jnp.mean(h, axis=-1, keepdims=True)
    var = jnp.mean((h - mu) ** 2, axis=-1, keepdims=True)
    hn = (h - mu) * jax.lax.rsqrt(var + 1e-5)
    o_ref[...] = (hn * g_ref[...] + b_ref[...]).astype(o_ref.dtype)


def layernorm_bf16(h, gamma, beta, *, token_tile=None):
    """h: (T, H) f32 -> LayerNorm(h) as (T, H) bf16."""
    T, H = h.shape
    tt = token_tile if token_tile is not None else _pick_tile(T, 512, 8)
    assert T % tt == 0
    return pl.pallas_call(
        _layernorm_kernel,
        out_shape=jax.ShapeDtypeStruct((T, H), jnp.bfloat16),
        grid_spec=pltpu.PrefetchScalarGridSpec(
            num_scalar_prefetch=0,
            grid=(T // tt,),
            in_specs=[
                pl.BlockSpec((tt, H), lambda i: (i, 0)),   # f32 hidden tile
                pl.BlockSpec((1, H), lambda i: (0, 0)),    # gamma
                pl.BlockSpec((1, H), lambda i: (0, 0)),    # beta
            ],
            out_specs=pl.BlockSpec((tt, H), lambda i: (i, 0)),
        ),
        compiler_params=pltpu.CompilerParams(
            dimension_semantics=("parallel",),
        ),
    )(h, gamma, beta)


# ----------------------------- lm_head kernel ---------------------------------
def _lm_head_kernel(hn_ref, w_ref, o_ref):
    """One (token tile) x (vocab tile) MXU matmul: bf16 x bf16 -> f32 accumulation."""
    o_ref[...] = jnp.dot(
        hn_ref[...], w_ref[...], preferred_element_type=jnp.float32
    ).astype(o_ref.dtype)


def lm_head_logits(hn, w_lm, *, token_tile=None, vocab_tile=None,
                   out_dtype=jnp.bfloat16):
    """hn: (T, H) bf16 normalized hidden, w_lm: (H, V) bf16 -> logits (T, V).

    Grid = (V // tv, T // tt): vocab OUTER / token INNER so the weight matrix
    streams from HBM exactly once; both axes 'parallel' (megacore on v7x)."""
    T, H = hn.shape
    Hw, V = w_lm.shape
    assert H == Hw

    phys = _physical_vmem_bytes()
    # Scoped-VMEM ceiling: ~8 MiB Mosaic headroom on the 64 MiB v7x part,
    # up to ~100 MiB on the 128 MiB v5e/v6e parts.
    vmem_cap = min(phys - (8 << 20), 100 << 20)

    out_bytes = jnp.dtype(out_dtype).itemsize
    hn_bytes = jnp.dtype(hn.dtype).itemsize
    w_bytes = jnp.dtype(w_lm.dtype).itemsize

    # Token tile: 16-row quantum (bf16 sublane packing), 512-row target so large-T
    # prefill reaches the MXU-bound regime on v6e/v7x.
    tt = token_tile if token_tile is not None else _pick_tile(T, 512, 16)

    # Vocab tile: multiple of 256 (v6e/v7x MXU width) when possible, else 128;
    # sized so double-buffered hidden/weight/output tiles fit the VMEM budget.
    vq = 256 if V % 256 == 0 else 128
    if vocab_tile is not None:
        tv = vocab_tile
    else:
        budget = vmem_cap - (4 << 20)
        avail = budget - 2 * tt * H * hn_bytes
        denom = 2 * (H * w_bytes + tt * out_bytes)
        tv_max = max(avail // denom, vq)
        tv = _pick_tile(V, min(int(tv_max), 4096), vq)

    assert T % tt == 0 and V % tv == 0

    est = 2 * (tt * H * hn_bytes + H * tv * w_bytes + tt * tv * out_bytes)
    vmem_limit = int(min(max(int(est * 1.5) + (2 << 20), 32 << 20), vmem_cap))

    grid = (V // tv, T // tt)

    return pl.pallas_call(
        _lm_head_kernel,
        out_shape=jax.ShapeDtypeStruct((T, V), out_dtype),
        grid_spec=pltpu.PrefetchScalarGridSpec(
            num_scalar_prefetch=0,
            grid=grid,
            in_specs=[
                # bf16 normalized hidden: changes along the inner (token) axis only.
                pl.BlockSpec((tt, H), lambda j, i: (i, 0)),
                # bf16 lm_head weight: changes along the outer (vocab) axis only,
                # so the whole HxV matrix is DMA'd from HBM exactly once.
                pl.BlockSpec((H, tv), lambda j, i: (0, j)),
            ],
            out_specs=pl.BlockSpec((tt, tv), lambda j, i: (i, j)),
        ),
        compiler_params=pltpu.CompilerParams(
            dimension_semantics=("parallel", "parallel"),
            vmem_limit_bytes=vmem_limit,
        ),
    )(hn, w_lm)


# ----------------------------- Model wrapper ---------------------------------
class NPUCausalLMPallas:
    """Synthetic stand-in for NPUCausalLM: embedding -> LN kernel -> lm_head kernel."""

    def __init__(self, vocab_size=1024, hidden_size=32, max_positions=64, key=None):
        self.vocab_size = vocab_size
        self.hidden_size = hidden_size
        if key is None:
            key = jax.random.PRNGKey(0)
        k1, k2, k3 = jax.random.split(key, 3)
        scale = 1.0 / jnp.sqrt(hidden_size)
        self.tok_emb = jax.random.normal(k1, (vocab_size, hidden_size), jnp.float32) * scale
        self.pos_emb = jax.random.normal(k2, (max_positions, hidden_size), jnp.float32) * scale
        # lm_head weights stored as bf16: halves the dominant HBM weight stream and
        # feeds the MXU at full bf16 rate (f32 accumulation inside the kernel).
        self.w_lm = (jax.random.normal(k3, (hidden_size, vocab_size), jnp.float32)
                     * scale).astype(jnp.bfloat16)
        self.ln_gamma = jnp.ones((1, hidden_size), jnp.float32)
        self.ln_beta = jnp.zeros((1, hidden_size), jnp.float32)

    def forward(self, input_ids, positions, input_block_ids,
                *, token_tile=None, vocab_tile=None, logits_dtype=jnp.bfloat16):
        """Mirrors NPUCausalLM.forward: logits = model(input_ids, cache_ids=positions,
        start_ids=input_block_ids)."""
        B, S = input_ids.shape
        # glue: embedding gathers (cache_ids == positions drive the positional lookup)
        h = self.tok_emb[input_ids] + self.pos_emb[positions]           # (B, S, H)
        h = h.reshape(B * S, self.hidden_size)                          # (tokens, hidden)
        # TODO(synk): start_ids / input_block_ids select KV-cache blocks inside the
        # opaque NPU model; there is no KV cache here, so they are accepted but unused.
        del input_block_ids
        hn = layernorm_bf16(h, self.ln_gamma, self.ln_beta, token_tile=token_tile)
        logits = lm_head_logits(hn, self.w_lm, token_tile=token_tile,
                                vocab_tile=vocab_tile, out_dtype=logits_dtype)
        return logits.reshape(B, S, self.vocab_size)

    def compute_logits(self, hidden_states):
        # LogitsProcessor(vocab_size, logits_as_input=True) with scale=1.0 is identity.
        return hidden_states

    def sample(self, logits):
        # On-device-sampling path of the reference: tensor already holds sampled ids.
        return logits.reshape(-1)


# ----------------------------------- main ------------------------------------
if __name__ == "__main__":
    key = jax.random.PRNGKey(0)
    k_model, k_ids = jax.random.split(key, 2)

    # Small shapes; chosen so the matmul kernel exercises a 2 (vocab) x 2 (token)
    # grid with the recommended 16-row token quantum.
    batch, seq, hidden, vocab = 2, 16, 32, 1024
    model = NPUCausalLMPallas(vocab_size=vocab, hidden_size=hidden,
                              max_positions=64, key=k_model)

    input_ids = jax.random.randint(k_ids, (batch, seq), 0, vocab, dtype=jnp.int32)
    positions = jnp.broadcast_to(jnp.arange(seq, dtype=jnp.int32), (batch, seq))
    input_block_ids = jnp.arange(batch, dtype=jnp.int32)

    logits = model.forward(input_ids, positions, input_block_ids,
                           token_tile=16, vocab_tile=512)
    logits = jax.block_until_ready(logits)

    # Correctness check against plain-JAX reference (matching bf16 matmul inputs
    # and bf16 logits output).
    h = (model.tok_emb[input_ids] + model.pos_emb[positions]).reshape(batch * seq, hidden)
    mu = h.mean(-1, keepdims=True)
    var = ((h - mu) ** 2).mean(-1, keepdims=True)
    hn = (h - mu) * jax.lax.rsqrt(var + 1e-5) * model.ln_gamma + model.ln_beta
    hn_bf = hn.astype(jnp.bfloat16).astype(jnp.float32)
    w_f32 = model.w_lm.astype(jnp.float32)
    ref = (hn_bf @ w_f32).reshape(batch, seq, vocab)

    assert logits.shape == (batch, seq, vocab)
    assert logits.dtype == jnp.bfloat16
    err = jnp.max(jnp.abs(logits.astype(jnp.float32) - ref))
    assert err < 5e-2, f"max abs error {err}"

    print("KERNEL_OK")
</pallas_src>

<mosaic_0001>
module attributes {stable_mosaic.version = 11 : i64} {
  func.func @_layernorm_kernel(%arg0: i32, %arg1: memref<16x32xf32, #tpu.memory_space<vmem>>, %arg2: memref<1x32xf32, #tpu.memory_space<vmem>>, %arg3: memref<1x32xf32, #tpu.memory_space<vmem>>, %arg4: memref<16x32xbf16, #tpu.memory_space<vmem>>) attributes {dimension_semantics = [#tpu.dimension_semantics<parallel>], iteration_bounds = array<i64: 2>, scalar_prefetch = 0 : i64, scratch_operands = 0 : i64, tpu.core_type = #tpu.core_type<tc>, window_params = [{transform_indices = @transform_0, window_bounds = array<i64: 16, 32>}, {pipeline_mode = #tpu.pipeline_mode<synchronous>, transform_indices = @transform_1, window_bounds = array<i64: 1, 32>}, {pipeline_mode = #tpu.pipeline_mode<synchronous>, transform_indices = @transform_2, window_bounds = array<i64: 1, 32>}, {transform_indices = @transform_3, window_bounds = array<i64: 16, 32>}]} {
    %c0 = arith.constant 0 : index
    %c0_0 = arith.constant 0 : index
    %0 = vector.load %arg1[%c0, %c0_0] : memref<16x32xf32, #tpu.memory_space<vmem>>, vector<16x32xf32>
    %cst = arith.constant dense<0.000000e+00> : vector<16xf32>
    %1 = vector.multi_reduction <add>, %0, %cst [1] : vector<16x32xf32> to vector<16xf32>
    %2 = vector.shape_cast %1 : vector<16xf32> to vector<16x1xf32>
    %cst_1 = arith.constant 3.200000e+01 : f32
    %3 = vector.broadcast %cst_1 : f32 to vector<16x1xf32>
    %4 = arith.divf %2, %3 : vector<16x1xf32>
    %5 = vector.broadcast %4 : vector<16x1xf32> to vector<16x32xf32>
    %6 = arith.subf %0, %5 : vector<16x32xf32>
    %7 = arith.mulf %6, %6 : vector<16x32xf32>
    %cst_2 = arith.constant dense<0.000000e+00> : vector<16xf32>
    %8 = vector.multi_reduction <add>, %7, %cst_2 [1] : vector<16x32xf32> to vector<16xf32>
    %9 = vector.shape_cast %8 : vector<16xf32> to vector<16x1xf32>
    %cst_3 = arith.constant 3.200000e+01 : f32
    %10 = vector.broadcast %cst_3 : f32 to vector<16x1xf32>
    %11 = arith.divf %9, %10 : vector<16x1xf32>
    %12 = vector.broadcast %4 : vector<16x1xf32> to vector<16x32xf32>
    %13 = arith.subf %0, %12 : vector<16x32xf32>
    %cst_4 = arith.constant 9.99999974E-6 : f32
    %14 = vector.broadcast %cst_4 : f32 to vector<16x1xf32>
    %15 = arith.addf %11, %14 : vector<16x1xf32>
    %16 = math.rsqrt %15 : vector<16x1xf32>
    %17 = vector.broadcast %16 : vector<16x1xf32> to vector<16x32xf32>
    %18 = arith.mulf %13, %17 : vector<16x32xf32>
    %c0_5 = arith.constant 0 : index
    %c0_6 = arith.constant 0 : index
    %19 = vector.load %arg2[%c0_5, %c0_6] : memref<1x32xf32, #tpu.memory_space<vmem>>, vector<1x32xf32>
    %20 = vector.broadcast %19 : vector<1x32xf32> to vector<16x32xf32>
    %21 = arith.mulf %18, %20 : vector<16x32xf32>
    %c0_7 = arith.constant 0 : index
    %c0_8 = arith.constant 0 : index
    %22 = vector.load %arg3[%c0_7, %c0_8] : memref<1x32xf32, #tpu.memory_space<vmem>>, vector<1x32xf32>
    %23 = vector.broadcast %22 : vector<1x32xf32> to vector<16x32xf32>
    %24 = arith.addf %21, %23 : vector<16x32xf32>
    %25 = arith.truncf %24 : vector<16x32xf32> to vector<16x32xbf16>
    %c0_9 = arith.constant 0 : index
    %c0_10 = arith.constant 0 : index
    %26 = vector.load %arg4[%c0_9, %c0_10] : memref<16x32xbf16, #tpu.memory_space<vmem>>, vector<16x32xbf16>
    tpu.vector_store %arg4[%c0_9, %c0_10], %25 {strides = array<i32>} : memref<16x32xbf16, #tpu.memory_space<vmem>>, vector<16x32xbf16>,
    return
  }
  func.func @transform_0(%arg0: i32) -> (i32, i32) {
    %c0_i32 = arith.constant 0 : i32
    %c0_i32_0 = arith.constant 0 : i32
    return %arg0, %c0_i32 : i32, i32
  }
  func.func @transform_1(%arg0: i32) -> (i32, i32) {
    %c0_i32 = arith.constant 0 : i32
    %c0_i32_0 = arith.constant 0 : i32
    %c0_i32_1 = arith.constant 0 : i32
    return %c0_i32, %c0_i32_0 : i32, i32
  }
  func.func @transform_2(%arg0: i32) -> (i32, i32) {
    %c0_i32 = arith.constant 0 : i32
    %c0_i32_0 = arith.constant 0 : i32
    %c0_i32_1 = arith.constant 0 : i32
    return %c0_i32, %c0_i32_0 : i32, i32
  }
  func.func @transform_3(%arg0: i32) -> (i32, i32) {
    %c0_i32 = arith.constant 0 : i32
    %c0_i32_0 = arith.constant 0 : i32
    return %arg0, %c0_i32 : i32, i32
  }
}

</mosaic_0001>

<llo_original>
// kernel: tpu_custom_call.1
$region0: #{tpu_custom_call.1}
  #allocation0 [shape = 'u32[]', space=smem, size = 0x4, offset = 0x4, fixed_abs, tag = 'smem constant byte address 0x4 - core index']
  #allocation1 [shape = 'u32[144,128]{1,0:T(1,128)}', space=vmem, size = 0x12000, scoped, tag = 'internal scratch']
  %s0 = inlined_call_operand.hbm [shape: f32[32,32], index: 0, kind: input, shape index: {}]
  %s1 = inlined_call_operand.vmem [shape: f32[1,32], index: 1, kind: input, shape index: {}]
  %s2 = inlined_call_operand.vmem [shape: f32[1,32], index: 2, kind: input, shape index: {}]
  %s3 = inlined_call_operand.hbm [shape: bf16[32,32], index: 3, kind: output, shape index: {}]
  %s4 = sld [smem:[#allocation0]]
  $region49: #{tpu_custom_call.1} parent=0
    _
  %s6 = ssub.s32 1, %s4
  %s7 = scalar_select 0, %s6, %s4
  $region1: #{tpu_custom_call.1} parent=0
    #allocation2 [shape = 'u8[16384]{0}', space=vmem, size = 0x4000, scoped, tag = 'input window, operand 0']
    #allocation3 [shape = 's32[2]{0}', space=sflag, size = 0x8, scoped, tag = 'scoped memory for tpu_custom_call.1']
    #allocation4 [shape = 's32[2]{0}', space=sflag, size = 0x8, scoped, tag = 'scoped memory for tpu_custom_call.1']
    #allocation5 [shape = 'u8[8192]{0}', space=vmem, size = 0x2000, scoped, tag = 'output window, operand 0']
    %8 = vsyncpa [#allocation3], 0
    %s9 = scalar_lea.sflag [#allocation3], 1
    %10 = vsyncpa %s9, 0
    %11 = vsyncpa [#allocation4], 0
    %s12 = scalar_lea.sflag [#allocation4], 1
    %13 = vsyncpa %s12, 0
    loop: start=0, step=1, limit=4
    $region2: #{tpu_custom_call.1} parent=1 // loop_pre_header
      _
    $region3: #{tpu_custom_call.1} parent=1 // loop_header
      %s15 = sphi 0, %s19
      %p16 = scmp.ge.s32.totalorder %s15, 4
      %s25 = sphi 0, %s27
      %s28 = sphi 0, %s25
      %s29 = sphi 0, %s28
      %s45 = sphi 0, %s29
      %s49 = sphi 0, %s49
      %s51 = sphi 0, %s49
      %s52 = sphi 0, %s51
      %s66 = sphi 0, %s52
      %s70 = sphi 0, %s70
      %s72 = sphi 0, %s70
      %s73 = sphi 0, %s72
      %s87 = sphi 0, %s73
      %s93 = sphi 0, %s95
      %s96 = sphi 0, %s93
      %s97 = sphi 0, %s96
      %s113 = sphi 0, %s97
    $region4: #{tpu_custom_call.1} parent=1 // loop_header_branch
      %18 = sbr.rel (%p16) target = $region8
    $region5: #{tpu_custom_call.1} parent=1 // loop_body
      %s20 = ssub.s32 %s15, 1
      %s21 = ssub.s32 %s15, 2
      %s22 = sadd.s32 %s15, 1
      %s23 = ssub.s32 %s15, %s22
      %p24 = scmp.eq.s32.totalorder %s23, 0
      %s26 = sadd.s32 %s25, 1
      %s27 = scalar_select %p24, %s25, %s26
      %p30 = pneg %p24
      %p31 = scmp.eq.s32.totalorder %s15, 1
      %p32 = por %p30, %p31
      %p33 = scmp.ne.s32.totalorder %s25, %s28
      %p34 = scmp.eq.s32.totalorder %s15, 0
      %p35 = por %p33, %p34
      %p36 = scmp.ne.s32.totalorder %s25, %s28
      %p37 = scmp.eq.s32.totalorder %s20, 1
      %p38 = por %p36, %p37
      %p39 = scmp.ne.s32.totalorder %s28, %s29
      %p40 = scmp.eq.s32.totalorder %s20, 0
      %p41 = por %p39, %p40
      %p42 = scmp.ne.s32.totalorder %s28, %s29
      %p43 = scmp.eq.s32.totalorder %s21, 1
      %p44 = por %p42, %p43
      %p46 = scmp.ne.s32.totalorder %s29, %s45
      %p47 = scmp.eq.s32.totalorder %s21, 0
      %p48 = por %p46, %p47
      %s50 = sadd.s32 %s49, 1
      %p53 = scmp.eq.s32.totalorder %s15, 1
      %p54 = scmp.ne.s32.totalorder %s49, %s51
      %p55 = scmp.eq.s32.totalorder %s15, 0
      %p56 = por %p54, %p55
      %p57 = scmp.ne.s32.totalorder %s49, %s51
      %p58 = scmp.eq.s32.totalorder %s20, 1
      %p59 = por %p57, %p58
      %p60 = scmp.ne.s32.totalorder %s51, %s52
      %p61 = scmp.eq.s32.totalorder %s20, 0
      %p62 = por %p60, %p61
      %p63 = scmp.ne.s32.totalorder %s51, %s52
      %p64 = scmp.eq.s32.totalorder %s21, 1
      %p65 = por %p63, %p64
      %p67 = scmp.ne.s32.totalorder %s52, %s66
      %p68 = scmp.eq.s32.totalorder %s21, 0
      %p69 = por %p67, %p68
      %s71 = sadd.s32 %s70, 1
      %p74 = scmp.eq.s32.totalorder %s15, 1
      %p75 = scmp.ne.s32.totalorder %s70, %s72
      %p76 = scmp.eq.s32.totalorder %s15, 0
      %p77 = por %p75, %p76
      %p78 = scmp.ne.s32.totalorder %s70, %s72
      %p79 = scmp.eq.s32.totalorder %s20, 1
      %p80 = por %p78, %p79
      %p81 = scmp.ne.s32.totalorder %s72, %s73
      %p82 = scmp.eq.s32.totalorder %s20, 0
      %p83 = por %p81, %p82
      %p84 = scmp.ne.s32.totalorder %s72, %s73
      %p85 = scmp.eq.s32.totalorder %s21, 1
      %p86 = por %p84, %p85
      %p88 = scmp.ne.s32.totalorder %s73, %s87
      %p89 = scmp.eq.s32.totalorder %s21, 0
      %p90 = por %p88, %p89
      %s91 = ssub.s32 %s15, %s22
      %p92 = scmp.eq.s32.totalorder %s91, 0
      %s94 = sadd.s32 %s93, 1
      %s95 = scalar_select %p92, %s93, %s94
      %p98 = pneg %p92
      %p99 = scmp.eq.s32.totalorder %s15, 1
      %p100 = por %p98, %p99
      %p101 = scmp.ne.s32.totalorder %s93, %s96
      %p102 = scmp.eq.s32.totalorder %s15, 0
      %p103 = por %p101, %p102
      %p104 = scmp.ne.s32.totalorder %s93, %s96
      %p105 = scmp.eq.s32.totalorder %s20, 1
      %p106 = por %p104, %p105
      %p107 = scmp.ne.s32.totalorder %s96, %s97
      %p108 = scmp.eq.s32.totalorder %s20, 0
      %p109 = por %p107, %p108
      %p110 = scmp.ne.s32.totalorder %s96, %s97
      %p111 = scmp.eq.s32.totalorder %s21, 1
      %p112 = por %p110, %p111
      %p114 = scmp.ne.s32.totalorder %s97, %s113
      %p115 = scmp.eq.s32.totalorder %s21, 0
      %p116 = por %p114, %p115
      %p117 = scmp.le.s32.totalorder 1, %s15
      %p118 = scmp.lt.s32.totalorder %s15, 3
      %p119 = pnand %p117, %p118
      %p120 = pneg %p119
      // Predicated region
      $region9: #{tpu_custom_call.1} parent=5 // pred_check
        _
      $region10: #{tpu_custom_call.1} parent=5 // pred_check_branch
        %122 = sbr.rel (%p119) target = $region12
      $region11: #{tpu_custom_call.1} parent=5 // pred_region
        %s123 = ssub.s32 %s15, 1
        // Predicated region
        $region13: #{tpu_custom_call.1} parent=11 // pred_check
          %p124 = pneg %p62
        $region14: #{tpu_custom_call.1} parent=11 // pred_check_branch
          %126 = sbr.rel (%p124) target = $region16
        $region15: #{tpu_custom_call.1} parent=11 // pred_region
          _
        $region16: #{tpu_custom_call.1} parent=11 // pred_fallthru
          _
        // Predicated region
        $region17: #{tpu_custom_call.1} parent=11 // pred_check
          %p127 = pneg %p83
        $region18: #{tpu_custom_call.1} parent=11 // pred_check_branch
          %129 = sbr.rel (%p127) target = $region20
        $region19: #{tpu_custom_call.1} parent=11 // pred_region
          _
        $region20: #{tpu_custom_call.1} parent=11 // pred_fallthru
          _
      $region12: #{tpu_custom_call.1} parent=5 // pred_fallthru
        _
      %p130 = scmp.lt.s32.totalorder %s15, 2
      // Predicated region
      $region21: #{tpu_custom_call.1} parent=5 // pred_check
        %p131 = pneg %p130
      $region22: #{tpu_custom_call.1} parent=5 // pred_check_branch
        %133 = sbr.rel (%p131) target = $region24
      $region23: #{tpu_custom_call.1} parent=5 // pred_region
        // Predicated region
        $region25: #{tpu_custom_call.1} parent=23 // pred_check
          %p134 = pneg %p35
        $region26: #{tpu_custom_call.1} parent=23 // pred_check_branch
          %136 = sbr.rel (%p134) target = $region28
        $region27: #{tpu_custom_call.1} parent=23 // pred_region
          %s137 = sand.u32 %s25, 1
          %s138 = scalar_lea.sflag [#allocation3], %s137
          %s139 = sand.u32 %s25, 1
          %s140 = smul.addr %s139, 16
          %s141 = scalar_lea.vmem [#allocation2], %s140
          %s142 = smul.u32 2, %s15
          %s144 = ssub.s32 256, 256
          %145 = vsyncadd %s138, %s144
          %s146 = smul.addr %s142, 128
          %s147 = scalar_lea.hbm %s0, %s146
          %s148 = sshll.u32 %s141, 4
          %s149 = int_to_ptr.vmem [resolvable:$true] %s148
          %154 = dma.hbm_to_vmem [thread:$0]  %s147, 256, %s149, %s138, 128, 128, 8
        $region28: #{tpu_custom_call.1} parent=23 // pred_fallthru
          _
      $region24: #{tpu_custom_call.1} parent=5 // pred_fallthru
        _
      %p155 = scmp.le.s32.totalorder 1, %s15
      %p156 = scmp.lt.s32.totalorder %s15, 3
      %p157 = pnand %p155, %p156
      %p158 = pneg %p157
      // Predicated region
      $region29: #{tpu_custom_call.1} parent=5 // pred_check
        _
      $region30: #{tpu_custom_call.1} parent=5 // pred_check_branch
        %160 = sbr.rel (%p157) target = $region32
      $region31: #{tpu_custom_call.1} parent=5 // pred_region
        %s161 = ssub.s32 %s15, 1
        %s162 = sand.u32 %s28, 1
        %s163 = scalar_lea.sflag [#allocation3], %s162
        %s164 = sand.u32 %s28, 1
        %s165 = smul.addr %s164, 16
        %s166 = scalar_lea.vmem [#allocation2], %s165
        // Predicated region
        $region33: #{tpu_custom_call.1} parent=31 // pred_check
          %p167 = pneg %p41
        $region34: #{tpu_custom_call.1} parent=31 // pred_check_branch
          %169 = sbr.rel (%p167) target = $region36
        $region35: #{tpu_custom_call.1} parent=31 // pred_region
          %170 = dma.done %s163, 256
        $region36: #{tpu_custom_call.1} parent=31 // pred_fallthru
          _
        %s171 = sand.u32 %s28, 1
        %s172 = scalar_lea.sflag [#allocation3], %s171
        %s173 = sand.u32 %s28, 1
        %s174 = smul.addr %s173, 16
        %s175 = scalar_lea.vmem [#allocation2], %s174
        %p176 = pneg %p41
        %p177 = pneg %p38
        %p178 = pneg %p62
        %p179 = pneg %p59
        %p180 = pneg %p83
        %p181 = pneg %p80
        %p182 = pneg %p109
        %p183 = pneg %p106
        %s184 = sand.u32 %s96, 1
        %s185 = scalar_lea.sflag [#allocation4], %s184
        %s186 = sand.u32 %s96, 1
        %s187 = smul.addr %s186, 8
        %s188 = scalar_lea.vmem [#allocation5], %s187
        %s189 = smul.u32 2, %s20
        %s190 = smul.u32 2, %s20
        %v191 = vld [vmem:[%s166] sm:$0xff]
        %v192 = vld [vmem:[%s166 + $0x8] sm:$0xff]
        %vm193 = vcmask 261120
        %v194 = vsel %vm193, %v191, 0.0
        %195 = vadd.xlane.f32.xlu0 %v194
        %v196 = vpop.xlane.xlu0 %195
        %v197 = vsel %vm193, %v192, 0.0
        %198 = vadd.xlane.f32.xlu0 %v197
        %v199 = vpop.xlane.xlu0 %198
        %v200 = vrcp.pop 32.0
        %v201 = vmul.f32 %v196, %v200
        %v202 = vmul.f32 %v199, %v200
        %v203 = vsub.f32 %v191, %v201
        %v204 = vsub.f32 %v192, %v202
        %v205 = vmul.f32 %v203, %v203
        %v206 = vmul.f32 %v204, %v204
        %v207 = vsel %vm193, %v205, 0.0
        %208 = vadd.xlane.f32.xlu0 %v207
        %v209 = vpop.xlane.xlu0 %208
        %v210 = vsel %vm193, %v206, 0.0
        %211 = vadd.xlane.f32.xlu0 %v210
        %v212 = vpop.xlane.xlu0 %211
        %v213 = vmul.f32 %v209, %v200
        %v214 = vmul.f32 %v212, %v200
        %v215 = vadd.f32 %v213, 1e-05
        %v216 = vadd.f32 %v214, 1e-05
        %v217 = vrsqrt.pop %v215
        %v218 = vrsqrt.pop %v216
        %v219 = vmul.f32 %v203, %v217
        %v220 = vmul.f32 %v204, %v218
        %v221 = vld [vmem:[%s1] sm:$0x1]
        %v223 = vlaneseq
        %v224 = vshrl.u32 %v223, 7
        %v225 = vsub.s32 0, %v224
        %v226 = vrot.slane %v221, %v225
        %v228 = vmul.f32 %v219, %v226
        %v229 = vmul.f32 %v220, %v226
        %v230 = vld [vmem:[%s2] sm:$0x1]
        %v232 = vlaneseq
        %v233 = vshrl.u32 %v232, 7
        %v234 = vsub.s32 0, %v233
        %v235 = vrot.slane %v230, %v234
        %v237 = vadd.f32 %v228, %v235
        %v238 = vadd.f32 %v229, %v235
        %v239 = vpack.c.bf16 %v238, %v237
        %v241 = vunpack.c.l.b16 %v239
        %v242 = vunpack.c.h.b16 %v239
        %v243 = vpack.c.b16 %v241, %v241
        %v244 = vpack.c.b16 %v242, %v242
        %vm247 = vcmask 257024
        %248 = vst.msk [vmem:[%s188] sm:$0xf] %vm247, %v243
        %249 = vst.msk [vmem:[%s188 + $0x4] sm:$0xf] %vm247, %v244
        %s250 = sand.u32 %s96, 1
        %s251 = scalar_lea.sflag [#allocation4], %s250
        %s252 = sand.u32 %s96, 1
        %s253 = smul.addr %s252, 8
        %s254 = scalar_lea.vmem [#allocation5], %s253
        // Predicated region
        $region37: #{tpu_custom_call.1} parent=31 // pred_check
          %p255 = pneg %p106
        $region38: #{tpu_custom_call.1} parent=31 // pred_check_branch
          %257 = sbr.rel (%p255) target = $region40
        $region39: #{tpu_custom_call.1} parent=31 // pred_region
          %s258 = smul.u32 2, %s20
          %s260 = ssub.s32 128, 128
          %261 = vsyncadd %s251, %s260
          %s262 = smul.addr %s258, 64
          %s263 = scalar_lea.hbm %s3, %s262
          %s264 = sshll.u32 %s254, 4
          %s265 = int_to_ptr.vmem [resolvable:$true] %s264
          %270 = dma.vmem_to_hbm [thread:$0]  %s265, 128, %s263, %s251, 64, 64, 4
        $region40: #{tpu_custom_call.1} parent=31 // pred_fallthru
          _
      $region32: #{tpu_custom_call.1} parent=5 // pred_fallthru
        _
      %p271 = scmp.le.s32.totalorder 2, %s15
      // Predicated region
      $region41: #{tpu_custom_call.1} parent=5 // pred_check
        %p272 = pneg %p271
      $region42: #{tpu_custom_call.1} parent=5 // pred_check_branch
        %274 = sbr.rel (%p272) target = $region44
      $region43: #{tpu_custom_call.1} parent=5 // pred_region
        %s275 = ssub.s32 %s15, 2
        // Predicated region
        $region45: #{tpu_custom_call.1} parent=43 // pred_check
          %p276 = pneg %p112
        $region46: #{tpu_custom_call.1} parent=43 // pred_check_branch
          %278 = sbr.rel (%p276) target = $region48
        $region47: #{tpu_custom_call.1} parent=43 // pred_region
          %s279 = sand.u32 %s97, 1
          %s280 = scalar_lea.sflag [#allocation4], %s279
          %s281 = sand.u32 %s97, 1
          %s282 = smul.addr %s281, 8
          %s283 = scalar_lea.vmem [#allocation5], %s282
          %284 = dma.done %s280, 128
        $region48: #{tpu_custom_call.1} parent=43 // pred_fallthru
          _
      $region44: #{tpu_custom_call.1} parent=5 // pred_fallthru
        _
    $region6: #{tpu_custom_call.1} parent=1 // loop_footer
      %s19 = sadd.s32 1, %s15
    $region7: #{tpu_custom_call.1} parent=1 // loop_footer_branch
      %14 = sbr.rel target = $region3
    $region8: #{tpu_custom_call.1} parent=1 // loop_exit
      _
    %285 = vsyncpa [#allocation3], 1
    %s286 = scalar_lea.sflag [#allocation3], 1
    %287 = vsyncpa %s286, 1
    %288 = vsyncpa [#allocation4], 1
    %s289 = scalar_lea.sflag [#allocation4], 1
    %290 = vsyncpa %s289, 1

</llo_original>
